<compile_context>
chip_gen: v5e
topology: v5e:2x2
jax: 0.10.0
libtpu: 0.0.40
codegen_flags: <defaults>
</compile_context>

<pallas_src>
import jax
import jax.numpy as jnp
from jax.experimental import pallas as pl
from jax.experimental.pallas import tpu as pltpu

_LANES = 128
_SUBLANES = 8
_SUB_ROWS = 64          # in-kernel sub-chunk (keeps live vregs bounded)


def _make_ce_kernel(C, rows, sub_chunks, inner_steps, rows_valid,
                    lane_padded, needs_row_mask):
    """Builds the kernel with all tiling parameters baked in statically."""

    def kernel(logits_ref, target_ref, out_ref):
        # logits_ref : (C, rows, 128)  input dtype
        # target_ref : (rows, 128)     int32 class ids
        # out_ref    : (rows, 128)     f32 running per-lane loss sums
        #                              (resident across the inner grid axis)
        p = pl.program_id(1)
        i = pl.program_id(2)

        @pl.when(i == 0)
        def _():
            out_ref[...] = jnp.zeros_like(out_ref)

        # Unclamped global row index of this block (for validity masking).
        row_base = (p * inner_steps + i) * rows

        for (r0, csz) in sub_chunks:
            tgt = target_ref[pl.ds(r0, csz), :]                      # (csz,128)

            # Pass 1: running max over classes in the input dtype (exact).
            m = logits_ref[0, pl.ds(r0, csz), :]
            for c in range(1, C):
                m = jnp.maximum(m, logits_ref[c, pl.ds(r0, csz), :])
            m = m.astype(jnp.float32)

            # Pass 2: fused exp-sum + target-logit gather (no iota, no
            # materialized (C, rows, 128) tile).
            # TODO(synk): on v6e/v7x a bf16 exp path would trim EUP/VALU cost
            # for bf16 inputs; kept in f32 for bit-stable numerics.
            x0 = logits_ref[0, pl.ds(r0, csz), :].astype(jnp.float32)
            s = jnp.exp(x0 - m)
            t = jnp.where(tgt == 0, x0, 0.0)
            for c in range(1, C):
                x = logits_ref[c, pl.ds(r0, csz), :].astype(jnp.float32)
                s = s + jnp.exp(x - m)
                t = jnp.where(tgt == c, x, t)

            per_pixel = (m + jnp.log(s)) - t                 # lse - logit[tgt]

            if needs_row_mask or lane_padded:
                valid = None
                if needs_row_mask:
                    row_ids = (row_base + r0 +
                               jax.lax.broadcasted_iota(jnp.int32, (csz, 1), 0))
                    valid = row_ids < rows_valid             # (csz, 1)
                if lane_padded:
                    lane_ok = tgt >= 0                       # padded lanes = -1
                    valid = lane_ok if valid is None else (valid & lane_ok)
                per_pixel = jnp.where(valid, per_pixel, 0.0)

            out_ref[pl.ds(r0, csz), :] += per_pixel

    return kernel


def ce_loss_pallas(net_output, target, *, max_rows=512):
    """net_output: (B, C, H, W) float; target: (B, H, W) or (B, 1, H, W) int."""
    if target.ndim == net_output.ndim:            # (B, 1, H, W) -> (B, H, W)
        target = jnp.squeeze(target, axis=1)
    B, C, H, W = net_output.shape
    HW = H * W
    N = B * HW                                    # mean denominator

    lane_pad = (-HW) % _LANES
    lane_padded = lane_pad != 0
    logits = net_output.reshape(B, C, HW)
    tgt = target.astype(jnp.int32).reshape(B, HW)
    if lane_padded:
        # TODO(synk): this pad materializes an HBM copy of the logits; it is
        # only taken when H*W is not a multiple of 128.
        logits = jnp.pad(logits, ((0, 0), (0, 0), (0, lane_pad)))
        tgt = jnp.pad(tgt, ((0, 0), (0, lane_pad)), constant_values=-1)
    rows_total = (HW + lane_pad) // _LANES
    logits = logits.reshape(B, C, rows_total, _LANES)
    tgt = tgt.reshape(B, rows_total, _LANES)

    # ---- per-generation VMEM sizing (explicit double-buffer accounting) ----
    try:
        vmem_cap = int(pltpu.get_tpu_info().vmem_capacity_bytes)
    except Exception:
        vmem_cap = 64 << 20                       # v7x per-core VMEM (smallest)
    itemsize = jnp.dtype(net_output.dtype).itemsize
    tile_budget = min(int(vmem_cap * 0.55), 48 << 20) - (2 << 20)  # temp slack
    bytes_per_row = (2 * C * _LANES * itemsize    # logits, double-buffered
                     + 2 * _LANES * 4             # int32 target, double-buffered
                     + 2 * _LANES * 4)            # f32 accumulator block
    budget_rows = max(_SUBLANES, tile_budget // bytes_per_row)
    budget_rows = min(budget_rows, max_rows)
    if budget_rows >= _SUB_ROWS:
        budget_rows = (budget_rows // _SUB_ROWS) * _SUB_ROWS
    else:
        budget_rows = (budget_rows // _SUBLANES) * _SUBLANES

    if rows_total <= budget_rows:
        rows = rows_total                         # full extent: always legal
    else:
        rows = budget_rows                        # multiple of 8 (and of 64)

    # v7x has 2 TensorCores sharing the parallel grid axes: if B == 1, split
    # the pixel axis into 2 parallel super-chunks so both cores get work.
    P = 2 if (B == 1 and rows_total >= 2 * rows) else 1
    inner_steps = pl.cdiv(rows_total, P * rows)
    n_row_blocks = pl.cdiv(rows_total, rows)
    needs_row_mask = (P * inner_steps * rows) > rows_total
    needs_clamp = (P * inner_steps - 1) * rows >= rows_total

    # Static in-kernel sub-chunks (handles ragged `rows`).
    sub_chunks = []
    r0 = 0
    while r0 < rows:
        csz = min(_SUB_ROWS, rows - r0)
        sub_chunks.append((r0, csz))
        r0 += csz

    kernel = _make_ce_kernel(C, rows, tuple(sub_chunks), inner_steps,
                             rows_total, lane_padded, needs_row_mask)

    if needs_clamp:
        def row_block(p, i):
            return jnp.minimum(p * inner_steps + i, n_row_blocks - 1)
    else:
        def row_block(p, i):
            return p * inner_steps + i

    def logits_map(b, p, i):
        return (b, 0, row_block(p, i), 0)

    def target_map(b, p, i):
        return (b, row_block(p, i), 0)

    def out_map(b, p, i):
        return (b, p, 0, 0)

    grid = (B, P, inner_steps)
    vmem_limit = int(min(vmem_cap * 9 // 10, 64 << 20))

    partial = pl.pallas_call(
        kernel,
        out_shape=jax.ShapeDtypeStruct((B, P, rows, _LANES), jnp.float32),
        grid_spec=pltpu.PrefetchScalarGridSpec(
            num_scalar_prefetch=0,
            grid=grid,
            in_specs=[
                pl.BlockSpec((None, C, rows, _LANES), logits_map),
                pl.BlockSpec((None, rows, _LANES), target_map),
            ],
            out_specs=pl.BlockSpec((None, None, rows, _LANES), out_map),
        ),
        compiler_params=pltpu.CompilerParams(
            dimension_semantics=("parallel", "parallel", "arbitrary"),
            vmem_limit_bytes=vmem_limit,
        ),
    )(logits, tgt)

    # TODO(synk): ignore_index / class weights / label smoothing of
    # nn.CrossEntropyLoss are not supported (module uses defaults).
    return jnp.sum(partial) / jnp.float32(N)


def ce_loss_ref(net_output, target):
    """Pure-JAX reference matching torch.nn.CrossEntropyLoss (mean reduction)."""
    if target.ndim == net_output.ndim:
        target = jnp.squeeze(target, axis=1)
    logits = jnp.moveaxis(net_output, 1, -1)                 # (B, H, W, C)
    logz = jax.nn.logsumexp(logits, axis=-1)
    tgt_logit = jnp.take_along_axis(
        logits, target[..., None].astype(jnp.int32), axis=-1)[..., 0]
    return jnp.mean(logz - tgt_logit)


if __name__ == "__main__":
    key = jax.random.PRNGKey(0)
    k1, k2 = jax.random.split(key)

    B, C, H, W = 2, 4, 16, 16
    net_output = jax.random.normal(k1, (B, C, H, W), dtype=jnp.float32)
    target = jax.random.randint(k2, (B, 1, H, W), 0, C, dtype=jnp.int32)

    loss = jax.block_until_ready(ce_loss_pallas(net_output, target))
    ref = jax.block_until_ready(ce_loss_ref(net_output, target))

    assert jnp.allclose(loss, ref, rtol=1e-5, atol=1e-5), (loss, ref)
    print("KERNEL_OK")
</pallas_src>

<mosaic_0001>
module attributes {stable_mosaic.version = 11 : i64} {
  func.func @kernel(%arg0: i32, %arg1: i32, %arg2: i32, %arg3: memref<1x4x2x128xf32, #tpu.memory_space<vmem>>, %arg4: memref<1x2x128xi32, #tpu.memory_space<vmem>>, %arg5: memref<1x1x2x128xf32, #tpu.memory_space<vmem>>) attributes {dimension_semantics = [#tpu.dimension_semantics<parallel>, #tpu.dimension_semantics<parallel>, #tpu.dimension_semantics<arbitrary>], iteration_bounds = array<i64: 2, 1, 1>, scalar_prefetch = 0 : i64, scratch_operands = 0 : i64, tpu.core_type = #tpu.core_type<tc>, window_params = [{transform_indices = @transform_0, window_bounds = array<i64: 1, 4, 2, 128>}, {transform_indices = @transform_1, window_bounds = array<i64: 1, 2, 128>}, {transform_indices = @transform_2, window_bounds = array<i64: 1, 1, 2, 128>}]} {
    %c0_i32 = arith.constant 0 : i32
    %0 = arith.cmpi eq, %arg2, %c0_i32 : i32
    %1 = arith.extui %0 : i1 to i32
    %c0_i32_0 = arith.constant 0 : i32
    %2 = arith.cmpi ne, %1, %c0_i32_0 : i32
    scf.if %2 {
      %cst_41 = arith.constant 0.000000e+00 : f32
      %57 = vector.broadcast %cst_41 : f32 to vector<2x128xf32>
      %c0_42 = arith.constant 0 : index
      %c0_43 = arith.constant 0 : index
      %c0_44 = arith.constant 0 : index
      %c0_45 = arith.constant 0 : index
      %58 = vector.load %arg5[%c0_42, %c0_43, %c0_44, %c0_45] : memref<1x1x2x128xf32, #tpu.memory_space<vmem>>, vector<1x1x2x128xf32>
      %59 = vector.shape_cast %58 : vector<1x1x2x128xf32> to vector<2x128xf32>
      %60 = vector.shape_cast %57 : vector<2x128xf32> to vector<1x1x2x128xf32>
      tpu.vector_store %arg5[%c0_42, %c0_43, %c0_44, %c0_45], %60 {strides = array<i32>} : memref<1x1x2x128xf32, #tpu.memory_space<vmem>>, vector<1x1x2x128xf32>,
    } else {
    }
    %c0 = arith.constant 0 : index
    %c0_1 = arith.constant 0 : index
    %c0_2 = arith.constant 0 : index
    %3 = vector.load %arg4[%c0, %c0_1, %c0_2] : memref<1x2x128xi32, #tpu.memory_space<vmem>>, vector<1x2x128xi32>
    %4 = vector.shape_cast %3 : vector<1x2x128xi32> to vector<2x128xi32>
    %c0_3 = arith.constant 0 : index
    %c0_4 = arith.constant 0 : index
    %c0_5 = arith.constant 0 : index
    %c0_6 = arith.constant 0 : index
    %5 = vector.load %arg3[%c0_3, %c0_4, %c0_5, %c0_6] : memref<1x4x2x128xf32, #tpu.memory_space<vmem>>, vector<1x1x2x128xf32>
    %6 = vector.shape_cast %5 : vector<1x1x2x128xf32> to vector<2x128xf32>
    %c0_7 = arith.constant 0 : index
    %c1 = arith.constant 1 : index
    %c0_8 = arith.constant 0 : index
    %c0_9 = arith.constant 0 : index
    %7 = vector.load %arg3[%c0_7, %c1, %c0_8, %c0_9] : memref<1x4x2x128xf32, #tpu.memory_space<vmem>>, vector<1x1x2x128xf32>
    %8 = vector.shape_cast %7 : vector<1x1x2x128xf32> to vector<2x128xf32>
    %9 = arith.maximumf %6, %8 : vector<2x128xf32>
    %c0_10 = arith.constant 0 : index
    %c2 = arith.constant 2 : index
    %c0_11 = arith.constant 0 : index
    %c0_12 = arith.constant 0 : index
    %10 = vector.load %arg3[%c0_10, %c2, %c0_11, %c0_12] : memref<1x4x2x128xf32, #tpu.memory_space<vmem>>, vector<1x1x2x128xf32>
    %11 = vector.shape_cast %10 : vector<1x1x2x128xf32> to vector<2x128xf32>
    %12 = arith.maximumf %9, %11 : vector<2x128xf32>
    %c0_13 = arith.constant 0 : index
    %c3 = arith.constant 3 : index
    %c0_14 = arith.constant 0 : index
    %c0_15 = arith.constant 0 : index
    %13 = vector.load %arg3[%c0_13, %c3, %c0_14, %c0_15] : memref<1x4x2x128xf32, #tpu.memory_space<vmem>>, vector<1x1x2x128xf32>
    %14 = vector.shape_cast %13 : vector<1x1x2x128xf32> to vector<2x128xf32>
    %15 = arith.maximumf %12, %14 : vector<2x128xf32>
    %c0_16 = arith.constant 0 : index
    %c0_17 = arith.constant 0 : index
    %c0_18 = arith.constant 0 : index
    %c0_19 = arith.constant 0 : index
    %16 = vector.load %arg3[%c0_16, %c0_17, %c0_18, %c0_19] : memref<1x4x2x128xf32, #tpu.memory_space<vmem>>, vector<1x1x2x128xf32>
    %17 = vector.shape_cast %16 : vector<1x1x2x128xf32> to vector<2x128xf32>
    %18 = arith.subf %17, %15 : vector<2x128xf32>
    %19 = math.exp %18 : vector<2x128xf32>
    %c0_i32_20 = arith.constant 0 : i32
    %20 = vector.broadcast %c0_i32_20 : i32 to vector<2x128xi32>
    %21 = arith.cmpi eq, %4, %20 : vector<2x128xi32>
    %cst = arith.constant 0.000000e+00 : f32
    %22 = vector.broadcast %cst : f32 to vector<2x128xf32>
    %23 = arith.select %21, %17, %22 : vector<2x128xi1>, vector<2x128xf32>
    %c0_21 = arith.constant 0 : index
    %c1_22 = arith.constant 1 : index
    %c0_23 = arith.constant 0 : index
    %c0_24 = arith.constant 0 : index
    %24 = vector.load %arg3[%c0_21, %c1_22, %c0_23, %c0_24] : memref<1x4x2x128xf32, #tpu.memory_space<vmem>>, vector<1x1x2x128xf32>
    %25 = vector.shape_cast %24 : vector<1x1x2x128xf32> to vector<2x128xf32>
    %26 = arith.subf %25, %15 : vector<2x128xf32>
    %27 = math.exp %26 : vector<2x128xf32>
    %28 = arith.addf %19, %27 : vector<2x128xf32>
    %c1_i32 = arith.constant 1 : i32
    %29 = vector.broadcast %c1_i32 : i32 to vector<2x128xi32>
    %30 = arith.cmpi eq, %4, %29 : vector<2x128xi32>
    %31 = arith.select %30, %25, %23 : vector<2x128xi1>, vector<2x128xf32>
    %c0_25 = arith.constant 0 : index
    %c2_26 = arith.constant 2 : index
    %c0_27 = arith.constant 0 : index
    %c0_28 = arith.constant 0 : index
    %32 = vector.load %arg3[%c0_25, %c2_26, %c0_27, %c0_28] : memref<1x4x2x128xf32, #tpu.memory_space<vmem>>, vector<1x1x2x128xf32>
    %33 = vector.shape_cast %32 : vector<1x1x2x128xf32> to vector<2x128xf32>
    %34 = arith.subf %33, %15 : vector<2x128xf32>
    %35 = math.exp %34 : vector<2x128xf32>
    %36 = arith.addf %28, %35 : vector<2x128xf32>
    %c2_i32 = arith.constant 2 : i32
    %37 = vector.broadcast %c2_i32 : i32 to vector<2x128xi32>
    %38 = arith.cmpi eq, %4, %37 : vector<2x128xi32>
    %39 = arith.select %38, %33, %31 : vector<2x128xi1>, vector<2x128xf32>
    %c0_29 = arith.constant 0 : index
    %c3_30 = arith.constant 3 : index
    %c0_31 = arith.constant 0 : index
    %c0_32 = arith.constant 0 : index
    %40 = vector.load %arg3[%c0_29, %c3_30, %c0_31, %c0_32] : memref<1x4x2x128xf32, #tpu.memory_space<vmem>>, vector<1x1x2x128xf32>
    %41 = vector.shape_cast %40 : vector<1x1x2x128xf32> to vector<2x128xf32>
    %42 = arith.subf %41, %15 : vector<2x128xf32>
    %43 = math.exp %42 : vector<2x128xf32>
    %44 = arith.addf %36, %43 : vector<2x128xf32>
    %c3_i32 = arith.constant 3 : i32
    %45 = vector.broadcast %c3_i32 : i32 to vector<2x128xi32>
    %46 = arith.cmpi eq, %4, %45 : vector<2x128xi32>
    %47 = arith.select %46, %41, %39 : vector<2x128xi1>, vector<2x128xf32>
    %48 = math.log %44 : vector<2x128xf32>
    %49 = arith.addf %15, %48 : vector<2x128xf32>
    %50 = arith.subf %49, %47 : vector<2x128xf32>
    %c0_33 = arith.constant 0 : index
    %c0_34 = arith.constant 0 : index
    %c0_35 = arith.constant 0 : index
    %c0_36 = arith.constant 0 : index
    %51 = vector.load %arg5[%c0_33, %c0_34, %c0_35, %c0_36] : memref<1x1x2x128xf32, #tpu.memory_space<vmem>>, vector<1x1x2x128xf32>
    %52 = vector.shape_cast %51 : vector<1x1x2x128xf32> to vector<2x128xf32>
    %53 = arith.addf %52, %50 : vector<2x128xf32>
    %c0_37 = arith.constant 0 : index
    %c0_38 = arith.constant 0 : index
    %c0_39 = arith.constant 0 : index
    %c0_40 = arith.constant 0 : index
    %54 = vector.load %arg5[%c0_37, %c0_38, %c0_39, %c0_40] : memref<1x1x2x128xf32, #tpu.memory_space<vmem>>, vector<1x1x2x128xf32>
    %55 = vector.shape_cast %54 : vector<1x1x2x128xf32> to vector<2x128xf32>
    %56 = vector.shape_cast %53 : vector<2x128xf32> to vector<1x1x2x128xf32>
    tpu.vector_store %arg5[%c0_37, %c0_38, %c0_39, %c0_40], %56 {strides = array<i32>} : memref<1x1x2x128xf32, #tpu.memory_space<vmem>>, vector<1x1x2x128xf32>,
    return
  }
  func.func @transform_0(%arg0: i32, %arg1: i32, %arg2: i32) -> (i32, i32, i32, i32) {
    %c1_i32 = arith.constant 1 : i32
    %0 = arith.muli %arg1, %c1_i32 : i32
    %1 = arith.addi %0, %arg2 : i32
    %c0_i32 = arith.constant 0 : i32
    %c0_i32_0 = arith.constant 0 : i32
    %c0_i32_1 = arith.constant 0 : i32
    return %arg0, %c0_i32, %1, %c0_i32_0 : i32, i32, i32, i32
  }
  func.func @transform_1(%arg0: i32, %arg1: i32, %arg2: i32) -> (i32, i32, i32) {
    %c1_i32 = arith.constant 1 : i32
    %0 = arith.muli %arg1, %c1_i32 : i32
    %1 = arith.addi %0, %arg2 : i32
    %c0_i32 = arith.constant 0 : i32
    %c0_i32_0 = arith.constant 0 : i32
    return %arg0, %1, %c0_i32 : i32, i32, i32
  }
  func.func @transform_2(%arg0: i32, %arg1: i32, %arg2: i32) -> (i32, i32, i32, i32) {
    %c0_i32 = arith.constant 0 : i32
    %c0_i32_0 = arith.constant 0 : i32
    %c0_i32_1 = arith.constant 0 : i32
    return %arg0, %arg1, %c0_i32, %c0_i32_0 : i32, i32, i32, i32
  }
}

</mosaic_0001>

<llo_original>
// kernel: tpu_custom_call.1
$region0: #{tpu_custom_call.1}
  #allocation0 [shape = 'u32[]', space=smem, size = 0x4, offset = 0x4, fixed_abs, tag = 'smem constant byte address 0x4 - core index']
  #allocation1 [shape = 'u32[72,128]{1,0:T(1,128)}', space=vmem, size = 0x9000, scoped, tag = 'internal scratch']
  %s0 = inlined_call_operand.hbm [shape: f32[2,4,2,128], index: 0, kind: input, shape index: {}]
  %s1 = inlined_call_operand.hbm [shape: s32[2,2,128], index: 1, kind: input, shape index: {}]
  %s2 = inlined_call_operand.hbm [shape: f32[2,1,2,128], index: 2, kind: output, shape index: {}]
  %s3 = sld [smem:[#allocation0]]
  $region53: #{tpu_custom_call.1} parent=0
    _
  %s5 = ssub.s32 1, %s3
  %s6 = scalar_select 0, %s5, %s3
  $region1: #{tpu_custom_call.1} parent=0
    #allocation2 [shape = 'u8[8192]{0}', space=vmem, size = 0x2000, scoped, tag = 'input window, operand 0']
    #allocation3 [shape = 's32[2]{0}', space=sflag, size = 0x8, scoped, tag = 'scoped memory for tpu_custom_call.1']
    #allocation4 [shape = 's32[2]{0}', space=sflag, size = 0x8, scoped, tag = 'scoped memory for tpu_custom_call.1']
    #allocation5 [shape = 'u8[2048]{0}', space=vmem, size = 0x800, scoped, tag = 'input window, operand 1']
    #allocation6 [shape = 's32[2]{0}', space=sflag, size = 0x8, scoped, tag = 'scoped memory for tpu_custom_call.1']
    #allocation7 [shape = 'u8[2048]{0}', space=vmem, size = 0x800, scoped, tag = 'output window, operand 0']
    %7 = vsyncpa [#allocation3], 0
    %s8 = scalar_lea.sflag [#allocation3], 1
    %9 = vsyncpa %s8, 0
    %10 = vsyncpa [#allocation6], 0
    %s11 = scalar_lea.sflag [#allocation6], 1
    %12 = vsyncpa %s11, 0
    %13 = vsyncpa [#allocation4], 0
    %s14 = scalar_lea.sflag [#allocation4], 1
    %15 = vsyncpa %s14, 0
    loop: start=0, step=1, limit=4
    $region2: #{tpu_custom_call.1} parent=1 // loop_pre_header
      _
    $region3: #{tpu_custom_call.1} parent=1 // loop_header
      %s17 = sphi 0, %s21
      %p18 = scmp.ge.s32.totalorder %s17, 4
      %s24 = sphi 0, %s43
      %s25 = sphi 0, %s39
      %s26 = sphi 0, %s35
      %s27 = sphi 0, %s24
      %s28 = sphi 0, %s25
      %s29 = sphi 0, %s26
      %s30 = sphi 0, %s27
      %s31 = sphi 0, %s28
      %s32 = sphi 0, %s29
      %s50 = sphi 0, %s52
      %s53 = sphi 0, %s50
      %s54 = sphi 0, %s53
      %s70 = sphi 0, %s54
      %s80 = sphi 0, %s82
      %s83 = sphi 0, %s80
      %s84 = sphi 0, %s83
      %s100 = sphi 0, %s84
      %s108 = sphi 0, %s110
      %s111 = sphi 0, %s108
      %s112 = sphi 0, %s111
      %s128 = sphi 0, %s112
    $region4: #{tpu_custom_call.1} parent=1 // loop_header_branch
      %20 = sbr.rel (%p18) target = $region8
    $region5: #{tpu_custom_call.1} parent=1 // loop_body
      %s22 = ssub.s32 %s17, 1
      %s23 = ssub.s32 %s17, 2
      %s33 = sadd.s32 1, %s26
      %p34 = scmp.ge.s32.totalorder %s33, 1
      %s35 = scalar_select %p34, 0, %s33
      %s36 = sadd.s32 1, %s25
      %s37 = scalar_select %p34, %s36, %s25
      %p38 = scmp.ge.s32.totalorder %s37, 1
      %s39 = scalar_select %p38, 0, %s37
      %s40 = sadd.s32 1, %s24
      %s41 = scalar_select %p38, %s40, %s24
      %p42 = scmp.ge.s32.totalorder %s41, 2
      %s43 = scalar_select %p42, 0, %s41
      %s44 = sadd.s32 %s25, %s26
      %s45 = sadd.s32 %s39, %s35
      %s46 = ssub.s32 %s24, %s43
      %s47 = ssub.s32 %s44, %s45
      %s48 = sor.u32 %s46, %s47
      %p49 = scmp.eq.s32.totalorder %s48, 0
      %s51 = sadd.s32 %s50, 1
      %s52 = scalar_select %p49, %s50, %s51
      %p55 = pneg %p49
      %p56 = scmp.eq.s32.totalorder %s17, 1
      %p57 = por %p55, %p56
      %p58 = scmp.ne.s32.totalorder %s50, %s53
      %p59 = scmp.eq.s32.totalorder %s17, 0
      %p60 = por %p58, %p59
      %p61 = scmp.ne.s32.totalorder %s50, %s53
      %p62 = scmp.eq.s32.totalorder %s22, 1
      %p63 = por %p61, %p62
      %p64 = scmp.ne.s32.totalorder %s53, %s54
      %p65 = scmp.eq.s32.totalorder %s22, 0
      %p66 = por %p64, %p65
      %p67 = scmp.ne.s32.totalorder %s53, %s54
      %p68 = scmp.eq.s32.totalorder %s23, 1
      %p69 = por %p67, %p68
      %p71 = scmp.ne.s32.totalorder %s54, %s70
      %p72 = scmp.eq.s32.totalorder %s23, 0
      %p73 = por %p71, %p72
      %s74 = sadd.s32 %s25, %s26
      %s75 = sadd.s32 %s39, %s35
      %s76 = ssub.s32 %s24, %s43
      %s77 = ssub.s32 %s74, %s75
      %s78 = sor.u32 %s76, %s77
      %p79 = scmp.eq.s32.totalorder %s78, 0
      %s81 = sadd.s32 %s80, 1
      %s82 = scalar_select %p79, %s80, %s81
      %p85 = pneg %p79
      %p86 = scmp.eq.s32.totalorder %s17, 1
      %p87 = por %p85, %p86
      %p88 = scmp.ne.s32.totalorder %s80, %s83
      %p89 = scmp.eq.s32.totalorder %s17, 0
      %p90 = por %p88, %p89
      %p91 = scmp.ne.s32.totalorder %s80, %s83
      %p92 = scmp.eq.s32.totalorder %s22, 1
      %p93 = por %p91, %p92
      %p94 = scmp.ne.s32.totalorder %s83, %s84
      %p95 = scmp.eq.s32.totalorder %s22, 0
      %p96 = por %p94, %p95
      %p97 = scmp.ne.s32.totalorder %s83, %s84
      %p98 = scmp.eq.s32.totalorder %s23, 1
      %p99 = por %p97, %p98
      %p101 = scmp.ne.s32.totalorder %s84, %s100
      %p102 = scmp.eq.s32.totalorder %s23, 0
      %p103 = por %p101, %p102
      %s104 = ssub.s32 %s24, %s43
      %s105 = ssub.s32 %s25, %s39
      %s106 = sor.u32 %s104, %s105
      %p107 = scmp.eq.s32.totalorder %s106, 0
      %s109 = sadd.s32 %s108, 1
      %s110 = scalar_select %p107, %s108, %s109
      %p113 = pneg %p107
      %p114 = scmp.eq.s32.totalorder %s17, 1
      %p115 = por %p113, %p114
      %p116 = scmp.ne.s32.totalorder %s108, %s111
      %p117 = scmp.eq.s32.totalorder %s17, 0
      %p118 = por %p116, %p117
      %p119 = scmp.ne.s32.totalorder %s108, %s111
      %p120 = scmp.eq.s32.totalorder %s22, 1
      %p121 = por %p119, %p120
      %p122 = scmp.ne.s32.totalorder %s111, %s112
      %p123 = scmp.eq.s32.totalorder %s22, 0
      %p124 = por %p122, %p123
      %p125 = scmp.ne.s32.totalorder %s111, %s112
      %p126 = scmp.eq.s32.totalorder %s23, 1
      %p127 = por %p125, %p126
      %p129 = scmp.ne.s32.totalorder %s112, %s128
      %p130 = scmp.eq.s32.totalorder %s23, 0
      %p131 = por %p129, %p130
      %p132 = scmp.le.s32.totalorder 1, %s17
      %p133 = scmp.lt.s32.totalorder %s17, 3
      %p134 = pnand %p132, %p133
      %p135 = pneg %p134
      // Predicated region
      $region9: #{tpu_custom_call.1} parent=5 // pred_check
        _
      $region10: #{tpu_custom_call.1} parent=5 // pred_check_branch
        %137 = sbr.rel (%p134) target = $region12
      $region11: #{tpu_custom_call.1} parent=5 // pred_region
        %s138 = ssub.s32 %s17, 1
      $region12: #{tpu_custom_call.1} parent=5 // pred_fallthru
        _
      %p139 = scmp.lt.s32.totalorder %s17, 2
      // Predicated region
      $region13: #{tpu_custom_call.1} parent=5 // pred_check
        %p140 = pneg %p139
      $region14: #{tpu_custom_call.1} parent=5 // pred_check_branch
        %142 = sbr.rel (%p140) target = $region16
      $region15: #{tpu_custom_call.1} parent=5 // pred_region
        // Predicated region
        $region17: #{tpu_custom_call.1} parent=15 // pred_check
          %p143 = pneg %p60
        $region18: #{tpu_custom_call.1} parent=15 // pred_check_branch
          %145 = sbr.rel (%p143) target = $region20
        $region19: #{tpu_custom_call.1} parent=15 // pred_region
          %s146 = sand.u32 %s50, 1
          %s147 = scalar_lea.sflag [#allocation3], %s146
          %s148 = sand.u32 %s50, 1
          %s149 = smul.addr %s148, 8
          %s150 = scalar_lea.vmem [#allocation2], %s149
          %s151 = sadd.s32 %s25, %s26
          %153 = vsyncadd %s147, 0
          %s154 = smul.addr %s24, 4
          %s155 = sadd.s32 %s151, %s154
          %s156 = smul.addr %s155, 2
          %s157 = scalar_lea.hbm %s0, %s156
          %s158 = sshll.u32 %s157, 4
          %s159 = int_to_ptr.hbm [resolvable:$true] %s158
          %s160 = sshll.u32 %s150, 4
          %s161 = int_to_ptr.vmem [resolvable:$true] %s160
          %166 = dma.hbm_to_vmem [thread:$0]  %s159, 128, %s161, %s147, 32, 32, 2
        $region20: #{tpu_custom_call.1} parent=15 // pred_fallthru
          _
        // Predicated region
        $region21: #{tpu_custom_call.1} parent=15 // pred_check
          %p167 = pneg %p90
        $region22: #{tpu_custom_call.1} parent=15 // pred_check_branch
          %169 = sbr.rel (%p167) target = $region24
        $region23: #{tpu_custom_call.1} parent=15 // pred_region
          %s170 = sand.u32 %s80, 1
          %s171 = scalar_lea.sflag [#allocation6], %s170
          %s172 = sand.u32 %s80, 1
          %s173 = smul.addr %s172, 2
          %s174 = scalar_lea.vmem [#allocation5], %s173
          %s175 = sadd.s32 %s25, %s26
          %177 = vsyncadd %s171, 0
          %s178 = sadd.s32 %s175, %s24
          %s179 = smul.addr %s178, 2
          %s180 = scalar_lea.hbm %s1, %s179
          %s182 = sshll.u32 %s180, 4
          %s183 = int_to_ptr.hbm [resolvable:$true] %s182
          %s184 = sshll.u32 %s174, 4
          %s185 = int_to_ptr.vmem [resolvable:$true] %s184
          %187 = dma.hbm_to_vmem [thread:$0]  %s183, 32, %s185, %s171
        $region24: #{tpu_custom_call.1} parent=15 // pred_fallthru
          _
      $region16: #{tpu_custom_call.1} parent=5 // pred_fallthru
        _
      %p188 = scmp.le.s32.totalorder 1, %s17
      %p189 = scmp.lt.s32.totalorder %s17, 3
      %p190 = pnand %p188, %p189
      %p191 = pneg %p190
      // Predicated region
      $region25: #{tpu_custom_call.1} parent=5 // pred_check
        _
      $region26: #{tpu_custom_call.1} parent=5 // pred_check_branch
        %193 = sbr.rel (%p190) target = $region28
      $region27: #{tpu_custom_call.1} parent=5 // pred_region
        %s194 = ssub.s32 %s17, 1
        %s195 = sand.u32 %s53, 1
        %s196 = scalar_lea.sflag [#allocation3], %s195
        %s197 = sand.u32 %s53, 1
        %s198 = smul.addr %s197, 8
        %s199 = scalar_lea.vmem [#allocation2], %s198
        // Predicated region
        $region29: #{tpu_custom_call.1} parent=27 // pred_check
          %p200 = pneg %p66
        $region30: #{tpu_custom_call.1} parent=27 // pred_check_branch
          %202 = sbr.rel (%p200) target = $region32
        $region31: #{tpu_custom_call.1} parent=27 // pred_region
          %204 = dma.done %s196, 128
        $region32: #{tpu_custom_call.1} parent=27 // pred_fallthru
          _
        %s205 = sand.u32 %s83, 1
        %s206 = scalar_lea.sflag [#allocation6], %s205
        %s207 = sand.u32 %s83, 1
        %s208 = smul.addr %s207, 2
        %s209 = scalar_lea.vmem [#allocation5], %s208
        // Predicated region
        $region33: #{tpu_custom_call.1} parent=27 // pred_check
          %p210 = pneg %p96
        $region34: #{tpu_custom_call.1} parent=27 // pred_check_branch
          %212 = sbr.rel (%p210) target = $region36
        $region35: #{tpu_custom_call.1} parent=27 // pred_region
          %214 = dma.done %s206, 32
        $region36: #{tpu_custom_call.1} parent=27 // pred_fallthru
          _
        %s215 = sand.u32 %s53, 1
        %s216 = scalar_lea.sflag [#allocation3], %s215
        %s217 = sand.u32 %s53, 1
        %s218 = smul.addr %s217, 8
        %s219 = scalar_lea.vmem [#allocation2], %s218
        %p220 = pneg %p66
        %p221 = pneg %p63
        %s222 = sand.u32 %s83, 1
        %s223 = scalar_lea.sflag [#allocation6], %s222
        %s224 = sand.u32 %s83, 1
        %s225 = smul.addr %s224, 2
        %s226 = scalar_lea.vmem [#allocation5], %s225
        %p227 = pneg %p96
        %p228 = pneg %p93
        %p229 = pneg %p124
        %p230 = pneg %p121
        %s231 = sand.u32 %s111, 1
        %s232 = scalar_lea.sflag [#allocation4], %s231
        %s233 = sand.u32 %s111, 1
        %s234 = smul.addr %s233, 2
        %s235 = scalar_lea.vmem [#allocation7], %s234
        %s236 = sadd.s32 %s28, %s29
        %s237 = sadd.s32 %s28, %s29
        %p238 = scmp.eq.s32.totalorder %s29, 0
        // Predicated region
        $region37: #{tpu_custom_call.1} parent=27 // pred_check
          %p239 = pneg %p238
        $region38: #{tpu_custom_call.1} parent=27 // pred_check_branch
          %241 = sbr.rel (%p239) target = $region40
        $region39: #{tpu_custom_call.1} parent=27 // pred_region
          %242 = vst [vmem:[%s235] sm:$0x3] 0.0
        $region40: #{tpu_custom_call.1} parent=27 // pred_fallthru
          _
        %v243 = vld [vmem:[%s209] sm:$0x3]
        %v244 = vld [vmem:[%s199] sm:$0x3]
        %s245 = scalar_lea.vmem %s199, 2 [#allocation2]
        %v246 = vld [vmem:[%s245] sm:$0x3]
        %v247 = vmax.f32 %v244, %v246
        %s248 = scalar_lea.vmem %s199, 4 [#allocation2]
        %v249 = vld [vmem:[%s248] sm:$0x3]
        %v250 = vmax.f32 %v247, %v249
        %s251 = scalar_lea.vmem %s199, 6 [#allocation2]
        %v252 = vld [vmem:[%s251] sm:$0x3]
        %v253 = vmax.f32 %v250, %v252
        %v254 = vsub.f32 %v244, %v253
        %v255 = vmul.f32 %v254, 1.442695
        %v256 = vpow.pop %v255
        %vm257 = vcmp.eq.s32.totalorder %v243, 0
        %v258 = vsel %vm257, %v244, 0.0
        %v259 = vsub.f32 %v246, %v253
        %v260 = vmul.f32 %v259, 1.442695
        %v261 = vpow.pop %v260
        %v262 = vadd.f32 %v256, %v261
        %vm263 = vcmp.eq.s32.totalorder %v243, 1
        %v264 = vsel %vm263, %v246, %v258
        %v265 = vsub.f32 %v249, %v253
        %v266 = vmul.f32 %v265, 1.442695
        %v267 = vpow.pop %v266
        %v268 = vadd.f32 %v262, %v267
        %vm269 = vcmp.eq.s32.totalorder %v243, 2
        %v270 = vsel %vm269, %v249, %v264
        %v271 = vsub.f32 %v252, %v253
        %v272 = vmul.f32 %v271, 1.442695
        %v273 = vpow.pop %v272
        %v274 = vadd.f32 %v268, %v273
        %vm275 = vcmp.eq.s32.totalorder %v243, 3
        %v276 = vsel %vm275, %v252, %v270
        %v277 = vlog2.pop %v274
        %v278 = vmul.f32 %v277, 0.6931472
        %v279 = vadd.f32 %v253, %v278
        %v280 = vsub.f32 %v279, %v276
        %v281 = vld [vmem:[%s235] sm:$0x3]
        %v282 = vadd.f32 %v281, %v280
        %283 = vst [vmem:[%s235] sm:$0x3] %v282
        %s284 = sand.u32 %s111, 1
        %s285 = scalar_lea.sflag [#allocation4], %s284
        %s286 = sand.u32 %s111, 1
        %s287 = smul.addr %s286, 2
        %s288 = scalar_lea.vmem [#allocation7], %s287
        // Predicated region
        $region41: #{tpu_custom_call.1} parent=27 // pred_check
          %p289 = pneg %p121
        $region42: #{tpu_custom_call.1} parent=27 // pred_check_branch
          %291 = sbr.rel (%p289) target = $region44
        $region43: #{tpu_custom_call.1} parent=27 // pred_region
          %293 = vsyncadd %s285, 0
          %s294 = sadd.s32 %s28, %s27
          %s295 = smul.addr %s294, 2
          %s296 = scalar_lea.hbm %s2, %s295
          %s298 = sshll.u32 %s288, 4
          %s299 = int_to_ptr.vmem [resolvable:$true] %s298
          %s300 = sshll.u32 %s296, 4
          %s301 = int_to_ptr.hbm [resolvable:$true] %s300
          %303 = dma.vmem_to_hbm [thread:$0]  %s299, 32, %s301, %s285
        $region44: #{tpu_custom_call.1} parent=27 // pred_fallthru
          _
      $region28: #{tpu_custom_call.1} parent=5 // pred_fallthru
        _
      %p304 = scmp.le.s32.totalorder 2, %s17
      // Predicated region
      $region45: #{tpu_custom_call.1} parent=5 // pred_check
        %p305 = pneg %p304
      $region46: #{tpu_custom_call.1} parent=5 // pred_check_branch
        %307 = sbr.rel (%p305) target = $region48
      $region47: #{tpu_custom_call.1} parent=5 // pred_region
        %s308 = ssub.s32 %s17, 2
        // Predicated region
        $region49: #{tpu_custom_call.1} parent=47 // pred_check
          %p309 = pneg %p127
        $region50: #{tpu_custom_call.1} parent=47 // pred_check_branch
          %311 = sbr.rel (%p309) target = $region52
        $region51: #{tpu_custom_call.1} parent=47 // pred_region
          %s312 = sand.u32 %s112, 1
          %s313 = scalar_lea.sflag [#allocation4], %s312
          %s314 = sand.u32 %s112, 1
          %s315 = smul.addr %s314, 2
          %s316 = scalar_lea.vmem [#allocation7], %s315
          %318 = dma.done %s313, 32
        $region52: #{tpu_custom_call.1} parent=47 // pred_fallthru
          _
      $region48: #{tpu_custom_call.1} parent=5 // pred_fallthru
        _
    $region6: #{tpu_custom_call.1} parent=1 // loop_footer
      %s21 = sadd.s32 1, %s17
    $region7: #{tpu_custom_call.1} parent=1 // loop_footer_branch
      %16 = sbr.rel target = $region3
    $region8: #{tpu_custom_call.1} parent=1 // loop_exit
      _
    %319 = vsyncpa [#allocation3], 1
    %s320 = scalar_lea.sflag [#allocation3], 1
    %321 = vsyncpa %s320, 1
    %322 = vsyncpa [#allocation6], 1
    %s323 = scalar_lea.sflag [#allocation6], 1
    %324 = vsyncpa %s323, 1
    %325 = vsyncpa [#allocation4], 1
    %s326 = scalar_lea.sflag [#allocation4], 1
    %327 = vsyncpa %s326, 1

</llo_original>
